<compile_context>
chip_gen: v7x
topology: tpu7x:2x2x1
jax: 0.10.0
libtpu: 0.0.40
codegen_flags: <defaults>
</compile_context>

<pallas_src>
import functools

import jax
import jax.numpy as jnp
from jax import lax
from jax.experimental import pallas as pl
from jax.experimental.pallas import tpu as pltpu


_VMEM_TABLE_MAX = 8 * 1024 * 1024     # table-size cutoff for the VMEM-resident path
_VMEM_BLOCK_TARGET = 1 * 1024 * 1024  # target output-block bytes (VMEM path)
_HBM_BLOCK_TARGET = 2 * 1024 * 1024   # target output-block bytes (HBM path)
_INFLIGHT_TARGET = 2 * 1024 * 1024    # target bytes of row DMAs in flight (HBM path)
_MAX_TM = 2048                        # max gathered rows per grid step
_MAX_INFLIGHT = 64                    # max concurrent row DMAs (HBM path)
_UNROLL = 8                           # manual unroll factor for per-row loops


def _round_up(x, m):
    return (x + m - 1) // m * m


def _cdiv(a, b):
    return -(-a // b)


def _pick_tm(m, row_bytes, target_block_bytes):
    """Rows per grid step: ~target-sized blocks, >=2 steps when there is
    enough work (v7x megacore), multiple of 8, and tm = ceil(M/steps) so the
    padded tail stays below 8 rows per step (branch-free tail handling)."""
    total = m * max(row_bytes, 1)
    nsteps = max(1, _cdiv(total, target_block_bytes))
    if m >= 16:
        nsteps = max(nsteps, 2)              # give both v7x TensorCores work
    nsteps = max(nsteps, _cdiv(m, _MAX_TM))
    return max(8, _round_up(_cdiv(m, nsteps), 8))


# --------------------------------------------------------------------------
# Path 1: VMEM-resident table, in-VMEM dynamic row gather.
# --------------------------------------------------------------------------
def _gather_vmem_kernel(idx_ref, table_ref, o_ref):
    """Gather TM rows of the VMEM-resident table into the output block.

    idx_ref   : (M_pad,) int32 in SMEM (scalar prefetch) - gathered row ids
    table_ref : (N, D_pad) table, resident in VMEM (constant block index)
    o_ref     : (TM, D_pad) output block for this grid step
    """
    tm = o_ref.shape[0]
    base = pl.program_id(0) * tm

    def chunk(c, carry):
        r0 = c * _UNROLL
        for u in range(_UNROLL):             # manual 8x unroll (tm % 8 == 0)
            r = r0 + u
            row = idx_ref[base + r]
            o_ref[pl.ds(r, 1), :] = table_ref[pl.ds(row, 1), :]
        return carry

    lax.fori_loop(0, tm // _UNROLL, chunk, 0)


def _gather_vmem(x2d, flat_idx, M, N, D, d_pad, itemsize, table_vmem_bytes):
    row_bytes = d_pad * itemsize
    tm = _pick_tm(M, row_bytes, _VMEM_BLOCK_TARGET)
    m_pad = _round_up(M, tm)
    if m_pad != M:
        flat_idx = jnp.concatenate(
            [flat_idx, jnp.zeros((m_pad - M,), dtype=jnp.int32)])
    x_pad = x2d if d_pad == D else jnp.pad(x2d, ((0, 0), (0, d_pad - D)))

    out_block_bytes = tm * row_bytes
    # Table + output may each be double-buffered by the pipeline; add margin.
    vmem_limit = 2 * table_vmem_bytes + 2 * out_block_bytes + (4 << 20)
    vmem_limit = int(min(max(vmem_limit, 16 << 20), 48 << 20))

    out = pl.pallas_call(
        _gather_vmem_kernel,
        out_shape=jax.ShapeDtypeStruct((m_pad, d_pad), x2d.dtype),
        grid_spec=pltpu.PrefetchScalarGridSpec(
            num_scalar_prefetch=1,
            grid=(m_pad // tm,),
            # Constant block index -> table stays resident across grid steps.
            in_specs=[pl.BlockSpec((N, d_pad), lambda i, idx: (0, 0))],
            out_specs=pl.BlockSpec((tm, d_pad), lambda i, idx: (i, 0)),
        ),
        compiler_params=pltpu.CompilerParams(
            dimension_semantics=("parallel",),
            vmem_limit_bytes=vmem_limit),
        cost_estimate=pl.CostEstimate(
            flops=0, transcendentals=0,
            bytes_accessed=(N * d_pad + 2 * m_pad * d_pad) * itemsize),
    )(flat_idx, x_pad)
    return out[:M, :D]


# --------------------------------------------------------------------------
# Path 2: table in HBM, one DMA per gathered row, `depth` DMAs in flight.
# --------------------------------------------------------------------------
def _gather_hbm_kernel(idx_ref, x_hbm, o_ref, sems, *, depth):
    """Gather TM rows of x_hbm (HBM) straight into the output VMEM block
    using a rolling window of `depth` concurrent row DMAs.

    idx_ref : (M_pad,) int32 in SMEM (scalar prefetch)
    x_hbm   : (N, D) raw HBM ref (memory_space=pl.ANY)
    o_ref   : (TM, D) output block for this grid step
    sems    : (depth,) DMA semaphores (depth is a power of two)
    """
    tm = o_ref.shape[0]
    base = pl.program_id(0) * tm
    mask = depth - 1

    def start_row(r, row):
        pltpu.make_async_copy(
            x_hbm.at[pl.ds(row, 1), :],
            o_ref.at[pl.ds(r, 1), :],
            sems.at[r & mask],
        ).start()

    def wait_row(r):
        # The wait only needs a matching transfer shape + semaphore slot;
        # the source slice is a placeholder.
        pltpu.make_async_copy(
            x_hbm.at[pl.ds(0, 1), :],
            o_ref.at[pl.ds(r, 1), :],
            sems.at[r & mask],
        ).wait()

    # Prime: put `depth` row fetches in flight (fully unrolled at trace time).
    for r in range(depth):
        start_row(r, idx_ref[base + r])

    # Steady state: pre-read the refill indices from SMEM *before* any DMA
    # wait (waits break SMEM sst->sld forwarding), then retire row r and
    # immediately refill its semaphore slot.  Manual 8x unroll.
    if tm > depth:
        def steady(c, carry):
            r0 = c * _UNROLL
            rows = [idx_ref[base + r0 + u + depth] for u in range(_UNROLL)]
            for u in range(_UNROLL):
                wait_row(r0 + u)
                start_row(r0 + u + depth, rows[u])
            return carry

        lax.fori_loop(0, (tm - depth) // _UNROLL, steady, 0)

    # Drain the remaining in-flight fetches before the block is written back.
    for r in range(tm - depth, tm):
        wait_row(r)


def _gather_hbm(x2d, flat_idx, M, N, D, itemsize):
    row_bytes = max(D * itemsize, 1)
    tm = _pick_tm(M, row_bytes, _HBM_BLOCK_TARGET)
    m_pad = _round_up(M, tm)
    if m_pad != M:
        # Padded tail rows gather row 0 into output rows that are sliced off
        # afterwards; _pick_tm keeps this waste below 8 rows per grid step.
        flat_idx = jnp.concatenate(
            [flat_idx, jnp.zeros((m_pad - M,), dtype=jnp.int32)])

    # In-flight row DMAs sized toward a bandwidth-latency product target.
    depth = min(_MAX_INFLIGHT, max(8, _INFLIGHT_TARGET // row_bytes), tm)
    depth = 1 << (depth.bit_length() - 1)   # power of two for cheap slot math

    out_block_bytes = tm * D * itemsize
    vmem_limit = 2 * out_block_bytes + (4 << 20)
    vmem_limit = int(min(max(vmem_limit, 16 << 20), 48 << 20))

    out = pl.pallas_call(
        functools.partial(_gather_hbm_kernel, depth=depth),
        out_shape=jax.ShapeDtypeStruct((m_pad, D), x2d.dtype),
        grid_spec=pltpu.PrefetchScalarGridSpec(
            num_scalar_prefetch=1,
            grid=(m_pad // tm,),
            in_specs=[pl.BlockSpec(memory_space=pl.ANY)],   # raw HBM table
            out_specs=pl.BlockSpec((tm, D), lambda i, idx: (i, 0)),
            scratch_shapes=[pltpu.SemaphoreType.DMA((depth,))],
        ),
        compiler_params=pltpu.CompilerParams(
            dimension_semantics=("parallel",),
            vmem_limit_bytes=vmem_limit),
        cost_estimate=pl.CostEstimate(
            flops=0, transcendentals=0,
            bytes_accessed=2 * m_pad * D * itemsize),
    )(flat_idx, x2d)
    return out[:M]


# --------------------------------------------------------------------------
# Public wrapper: equivalent of PyTorch `input[index]`.
# --------------------------------------------------------------------------
def gather(input, index, *, _force_path=None):
    input = jnp.asarray(input)
    in_shape = tuple(input.shape)
    if len(in_shape) == 0:
        raise ValueError("gather: `input` must have at least one dimension")
    N = int(in_shape[0])
    rest = in_shape[1:]
    D = 1
    for s in rest:
        D *= int(s)

    index = jnp.asarray(index)
    out_shape = tuple(index.shape) + rest

    flat_idx = index.astype(jnp.int32).reshape(-1)
    M = int(flat_idx.shape[0])
    if M == 0 or N == 0 or D == 0:
        return jnp.zeros(out_shape, dtype=input.dtype)

    # PyTorch wraps negative indices; out-of-range indices are clamped (PyTorch
    # would raise) to keep the data-dependent loads/DMAs in bounds.
    flat_idx = jnp.where(flat_idx < 0, flat_idx + N, flat_idx)
    flat_idx = jnp.clip(flat_idx, 0, N - 1)

    x2d = input.reshape(N, D)
    itemsize = x2d.dtype.itemsize
    d_pad = _round_up(D, 128)
    table_vmem_bytes = _round_up(N, 32) * d_pad * itemsize

    if _force_path is None:
        use_vmem = table_vmem_bytes <= _VMEM_TABLE_MAX
    else:
        use_vmem = (_force_path == "vmem")

    if use_vmem:
        out2d = _gather_vmem(x2d, flat_idx, M, N, D, d_pad, itemsize,
                             table_vmem_bytes)
    else:
        out2d = _gather_hbm(x2d, flat_idx, M, N, D, itemsize)
    return out2d.reshape(out_shape)


if __name__ == "__main__":
    key = jax.random.PRNGKey(0)
    k_in, k_idx = jax.random.split(key)

    N, D = 16, 128
    table = jax.random.normal(k_in, (N, D), dtype=jnp.float32)
    index = jax.random.randint(k_idx, (2, 8), minval=-N, maxval=N,
                               dtype=jnp.int32)
    wrapped = jnp.where(index < 0, index + N, index)

    # VMEM-resident fast path (auto-selected for this small table).
    out_v = jax.block_until_ready(gather(table, index))
    ref = jnp.take(table, wrapped, axis=0)
    assert out_v.shape == ref.shape == (2, 8, D)
    assert jnp.allclose(out_v, ref), "VMEM-path gather mismatch vs reference"

    # Force the HBM per-row-DMA path on the same data.
    out_h = jax.block_until_ready(gather(table, index, _force_path="hbm"))
    assert jnp.allclose(out_h, ref), "HBM-path gather mismatch vs reference"

    # Higher-rank table with a non-128-multiple feature count (exercises the
    # lane-padding logic): (N, 4, 10) -> flattened D = 40, padded to 128.
    table3 = jax.random.normal(k_in, (N, 4, 10), dtype=jnp.float32)
    out3 = jax.block_until_ready(gather(table3, index))
    ref3 = jnp.take(table3, wrapped, axis=0)
    assert out3.shape == ref3.shape == (2, 8, 4, 10)
    assert jnp.allclose(out3, ref3), "rank-3 gather mismatch vs reference"

    # 1-D table -> per-element gather (D = 1 padded to 128 internally).
    vec = jax.random.normal(k_idx, (N,), dtype=jnp.float32)
    out1 = jax.block_until_ready(gather(vec, index))
    ref1 = jnp.take(vec, wrapped, axis=0)
    assert out1.shape == ref1.shape == (2, 8)
    assert jnp.allclose(out1, ref1), "1-D gather mismatch vs reference"

    print("KERNEL_OK")
</pallas_src>

<mosaic_0001>
module attributes {stable_mosaic.version = 11 : i64} {
  func.func @_gather_vmem_kernel(%arg0: i32, %arg1: memref<16xi32, #tpu.memory_space<smem>>, %arg2: memref<16x128xf32, #tpu.memory_space<vmem>>, %arg3: memref<8x128xf32, #tpu.memory_space<vmem>>) attributes {dimension_semantics = [#tpu.dimension_semantics<parallel>], iteration_bounds = array<i64: 2>, scalar_prefetch = 1 : i64, scratch_operands = 0 : i64, tpu.core_type = #tpu.core_type<tc>, window_params = [{pipeline_mode = #tpu.pipeline_mode<synchronous>, transform_indices = @transform_0, window_bounds = array<i64: 16, 128>}, {transform_indices = @transform_1, window_bounds = array<i64: 8, 128>}]} {
    %c8_i32 = arith.constant 8 : i32
    %0 = arith.muli %arg0, %c8_i32 : i32
    %c0_i32 = arith.constant 0 : i32
    %c8_i32_0 = arith.constant 8 : i32
    %1 = arith.muli %c0_i32, %c8_i32_0 : i32
    %c0_i32_1 = arith.constant 0 : i32
    %2 = arith.addi %1, %c0_i32_1 : i32
    %3 = arith.addi %0, %2 : i32
    %4 = arith.index_cast %3 : i32 to index
    %5 = memref.load %arg1[%4] : memref<16xi32, #tpu.memory_space<smem>>
    %6 = arith.index_cast %5 : i32 to index
    %c0 = arith.constant 0 : index
    %7 = vector.load %arg2[%6, %c0] : memref<16x128xf32, #tpu.memory_space<vmem>>, vector<1x128xf32>
    %8 = arith.index_cast %2 : i32 to index
    %c0_2 = arith.constant 0 : index
    %9 = vector.load %arg3[%8, %c0_2] : memref<8x128xf32, #tpu.memory_space<vmem>>, vector<1x128xf32>
    tpu.vector_store %arg3[%8, %c0_2], %7 {strides = array<i32>} : memref<8x128xf32, #tpu.memory_space<vmem>>, vector<1x128xf32>,
    %c1_i32 = arith.constant 1 : i32
    %10 = arith.addi %1, %c1_i32 : i32
    %11 = arith.addi %0, %10 : i32
    %12 = arith.index_cast %11 : i32 to index
    %13 = memref.load %arg1[%12] : memref<16xi32, #tpu.memory_space<smem>>
    %14 = arith.index_cast %13 : i32 to index
    %c0_3 = arith.constant 0 : index
    %15 = vector.load %arg2[%14, %c0_3] : memref<16x128xf32, #tpu.memory_space<vmem>>, vector<1x128xf32>
    %16 = arith.index_cast %10 : i32 to index
    %c0_4 = arith.constant 0 : index
    %17 = vector.load %arg3[%16, %c0_4] : memref<8x128xf32, #tpu.memory_space<vmem>>, vector<1x128xf32>
    tpu.vector_store %arg3[%16, %c0_4], %15 {strides = array<i32>} : memref<8x128xf32, #tpu.memory_space<vmem>>, vector<1x128xf32>,
    %c2_i32 = arith.constant 2 : i32
    %18 = arith.addi %1, %c2_i32 : i32
    %19 = arith.addi %0, %18 : i32
    %20 = arith.index_cast %19 : i32 to index
    %21 = memref.load %arg1[%20] : memref<16xi32, #tpu.memory_space<smem>>
    %22 = arith.index_cast %21 : i32 to index
    %c0_5 = arith.constant 0 : index
    %23 = vector.load %arg2[%22, %c0_5] : memref<16x128xf32, #tpu.memory_space<vmem>>, vector<1x128xf32>
    %24 = arith.index_cast %18 : i32 to index
    %c0_6 = arith.constant 0 : index
    %25 = vector.load %arg3[%24, %c0_6] : memref<8x128xf32, #tpu.memory_space<vmem>>, vector<1x128xf32>
    tpu.vector_store %arg3[%24, %c0_6], %23 {strides = array<i32>} : memref<8x128xf32, #tpu.memory_space<vmem>>, vector<1x128xf32>,
    %c3_i32 = arith.constant 3 : i32
    %26 = arith.addi %1, %c3_i32 : i32
    %27 = arith.addi %0, %26 : i32
    %28 = arith.index_cast %27 : i32 to index
    %29 = memref.load %arg1[%28] : memref<16xi32, #tpu.memory_space<smem>>
    %30 = arith.index_cast %29 : i32 to index
    %c0_7 = arith.constant 0 : index
    %31 = vector.load %arg2[%30, %c0_7] : memref<16x128xf32, #tpu.memory_space<vmem>>, vector<1x128xf32>
    %32 = arith.index_cast %26 : i32 to index
    %c0_8 = arith.constant 0 : index
    %33 = vector.load %arg3[%32, %c0_8] : memref<8x128xf32, #tpu.memory_space<vmem>>, vector<1x128xf32>
    tpu.vector_store %arg3[%32, %c0_8], %31 {strides = array<i32>} : memref<8x128xf32, #tpu.memory_space<vmem>>, vector<1x128xf32>,
    %c4_i32 = arith.constant 4 : i32
    %34 = arith.addi %1, %c4_i32 : i32
    %35 = arith.addi %0, %34 : i32
    %36 = arith.index_cast %35 : i32 to index
    %37 = memref.load %arg1[%36] : memref<16xi32, #tpu.memory_space<smem>>
    %38 = arith.index_cast %37 : i32 to index
    %c0_9 = arith.constant 0 : index
    %39 = vector.load %arg2[%38, %c0_9] : memref<16x128xf32, #tpu.memory_space<vmem>>, vector<1x128xf32>
    %40 = arith.index_cast %34 : i32 to index
    %c0_10 = arith.constant 0 : index
    %41 = vector.load %arg3[%40, %c0_10] : memref<8x128xf32, #tpu.memory_space<vmem>>, vector<1x128xf32>
    tpu.vector_store %arg3[%40, %c0_10], %39 {strides = array<i32>} : memref<8x128xf32, #tpu.memory_space<vmem>>, vector<1x128xf32>,
    %c5_i32 = arith.constant 5 : i32
    %42 = arith.addi %1, %c5_i32 : i32
    %43 = arith.addi %0, %42 : i32
    %44 = arith.index_cast %43 : i32 to index
    %45 = memref.load %arg1[%44] : memref<16xi32, #tpu.memory_space<smem>>
    %46 = arith.index_cast %45 : i32 to index
    %c0_11 = arith.constant 0 : index
    %47 = vector.load %arg2[%46, %c0_11] : memref<16x128xf32, #tpu.memory_space<vmem>>, vector<1x128xf32>
    %48 = arith.index_cast %42 : i32 to index
    %c0_12 = arith.constant 0 : index
    %49 = vector.load %arg3[%48, %c0_12] : memref<8x128xf32, #tpu.memory_space<vmem>>, vector<1x128xf32>
    tpu.vector_store %arg3[%48, %c0_12], %47 {strides = array<i32>} : memref<8x128xf32, #tpu.memory_space<vmem>>, vector<1x128xf32>,
    %c6_i32 = arith.constant 6 : i32
    %50 = arith.addi %1, %c6_i32 : i32
    %51 = arith.addi %0, %50 : i32
    %52 = arith.index_cast %51 : i32 to index
    %53 = memref.load %arg1[%52] : memref<16xi32, #tpu.memory_space<smem>>
    %54 = arith.index_cast %53 : i32 to index
    %c0_13 = arith.constant 0 : index
    %55 = vector.load %arg2[%54, %c0_13] : memref<16x128xf32, #tpu.memory_space<vmem>>, vector<1x128xf32>
    %56 = arith.index_cast %50 : i32 to index
    %c0_14 = arith.constant 0 : index
    %57 = vector.load %arg3[%56, %c0_14] : memref<8x128xf32, #tpu.memory_space<vmem>>, vector<1x128xf32>
    tpu.vector_store %arg3[%56, %c0_14], %55 {strides = array<i32>} : memref<8x128xf32, #tpu.memory_space<vmem>>, vector<1x128xf32>,
    %c7_i32 = arith.constant 7 : i32
    %58 = arith.addi %1, %c7_i32 : i32
    %59 = arith.addi %0, %58 : i32
    %60 = arith.index_cast %59 : i32 to index
    %61 = memref.load %arg1[%60] : memref<16xi32, #tpu.memory_space<smem>>
    %62 = arith.index_cast %61 : i32 to index
    %c0_15 = arith.constant 0 : index
    %63 = vector.load %arg2[%62, %c0_15] : memref<16x128xf32, #tpu.memory_space<vmem>>, vector<1x128xf32>
    %64 = arith.index_cast %58 : i32 to index
    %c0_16 = arith.constant 0 : index
    %65 = vector.load %arg3[%64, %c0_16] : memref<8x128xf32, #tpu.memory_space<vmem>>, vector<1x128xf32>
    tpu.vector_store %arg3[%64, %c0_16], %63 {strides = array<i32>} : memref<8x128xf32, #tpu.memory_space<vmem>>, vector<1x128xf32>,
    %c1_i32_17 = arith.constant 1 : i32
    return
  }
  func.func @transform_0(%arg0: i32, %arg1: memref<16xi32, #tpu.memory_space<smem>>) -> (i32, i32) {
    %c0_i32 = arith.constant 0 : i32
    %c0_i32_0 = arith.constant 0 : i32
    %c0_i32_1 = arith.constant 0 : i32
    return %c0_i32, %c0_i32_0 : i32, i32
  }
  func.func @transform_1(%arg0: i32, %arg1: memref<16xi32, #tpu.memory_space<smem>>) -> (i32, i32) {
    %c0_i32 = arith.constant 0 : i32
    %c0_i32_0 = arith.constant 0 : i32
    return %arg0, %c0_i32 : i32, i32
  }
}

</mosaic_0001>

<llo_original>
// kernel: tpu_custom_call.1
$region0: #{tpu_custom_call.1}
  #allocation0 [shape = 'u32[]', space=smem, size = 0x4, offset = 0x4, fixed_abs, tag = 'smem constant byte address 0x4 - core index']
  #allocation1 [shape = 'u32[144,128]{1,0:T(1,128)}', space=vmem, size = 0x12000, scoped, tag = 'internal scratch']
  #allocation2 [shape = 's32[1]{0}', space=sflag, size = 0x4, scoped, tag = 'scoped memory for tpu_custom_call.1']
  #allocation3 [shape = 'u8[512]{0}', space=smem, size = 0x200, scoped, tag = 'prefetched SMEM operand 0']
  %s0 = inlined_call_operand.hbm [shape: s32[16], index: 0, kind: input, shape index: {}]
  %s1 = inlined_call_operand.hbm [shape: f32[16,128], index: 1, kind: input, shape index: {}]
  %s2 = inlined_call_operand.hbm [shape: f32[16,128], index: 2, kind: output, shape index: {}]
  %s3 = sld [smem:[#allocation0]]
  $region41: #{tpu_custom_call.1} parent=0
    _
  %s5 = ssub.s32 1, %s3
  %s6 = scalar_select 0, %s5, %s3
  %8 = dma.hbm_to_smem %s0, 16, [#allocation3], [#allocation2]
  %9 = dma.done [#allocation2], 16
  %10 = sfence
  $region1: #{tpu_custom_call.1} parent=0
    #allocation4 [shape = 'u8[8192]{0}', space=vmem, size = 0x2000, scoped, tag = 'input window, operand 1, single buffered']
    #allocation5 [shape = 's32[2]{0}', space=sflag, size = 0x8, scoped, tag = 'scoped memory for tpu_custom_call.1']
    #allocation6 [shape = 's32[2]{0}', space=sflag, size = 0x8, scoped, tag = 'scoped memory for tpu_custom_call.1']
    #allocation7 [shape = 'u8[8192]{0}', space=vmem, size = 0x2000, scoped, tag = 'output window, operand 0']
    %11 = vsyncpa [#allocation5], 0
    %12 = vsyncpa [#allocation6], 0
    %s13 = scalar_lea.sflag [#allocation6], 1
    %14 = vsyncpa %s13, 0
    loop: start=0, step=1, limit=4
    $region2: #{tpu_custom_call.1} parent=1 // loop_pre_header
      _
    $region3: #{tpu_custom_call.1} parent=1 // loop_header
      %s16 = sphi 0, %s20
      %p17 = scmp.ge.s32.totalorder %s16, 4
      %s24 = sphi 0, %s24
      %s26 = sphi 0, %s24
      %s27 = sphi 0, %s26
      %s41 = sphi 0, %s27
      %s47 = sphi 0, %s49
      %s50 = sphi 0, %s47
      %s51 = sphi 0, %s50
      %s67 = sphi 0, %s51
    $region4: #{tpu_custom_call.1} parent=1 // loop_header_branch
      %19 = sbr.rel (%p17) target = $region8
    $region5: #{tpu_custom_call.1} parent=1 // loop_body
      %s21 = ssub.s32 %s16, 1
      %s22 = ssub.s32 %s16, 2
      %s23 = sadd.s32 %s16, 1
      %s25 = sadd.s32 %s24, 1
      %p28 = scmp.eq.s32.totalorder %s16, 1
      %p29 = scmp.ne.s32.totalorder %s24, %s26
      %p30 = scmp.eq.s32.totalorder %s16, 0
      %p31 = por %p29, %p30
      %p32 = scmp.ne.s32.totalorder %s24, %s26
      %p33 = scmp.eq.s32.totalorder %s21, 1
      %p34 = por %p32, %p33
      %p35 = scmp.ne.s32.totalorder %s26, %s27
      %p36 = scmp.eq.s32.totalorder %s21, 0
      %p37 = por %p35, %p36
      %p38 = scmp.ne.s32.totalorder %s26, %s27
      %p39 = scmp.eq.s32.totalorder %s22, 1
      %p40 = por %p38, %p39
      %p42 = scmp.ne.s32.totalorder %s27, %s41
      %p43 = scmp.eq.s32.totalorder %s22, 0
      %p44 = por %p42, %p43
      %s45 = ssub.s32 %s16, %s23
      %p46 = scmp.eq.s32.totalorder %s45, 0
      %s48 = sadd.s32 %s47, 1
      %s49 = scalar_select %p46, %s47, %s48
      %p52 = pneg %p46
      %p53 = scmp.eq.s32.totalorder %s16, 1
      %p54 = por %p52, %p53
      %p55 = scmp.ne.s32.totalorder %s47, %s50
      %p56 = scmp.eq.s32.totalorder %s16, 0
      %p57 = por %p55, %p56
      %p58 = scmp.ne.s32.totalorder %s47, %s50
      %p59 = scmp.eq.s32.totalorder %s21, 1
      %p60 = por %p58, %p59
      %p61 = scmp.ne.s32.totalorder %s50, %s51
      %p62 = scmp.eq.s32.totalorder %s21, 0
      %p63 = por %p61, %p62
      %p64 = scmp.ne.s32.totalorder %s50, %s51
      %p65 = scmp.eq.s32.totalorder %s22, 1
      %p66 = por %p64, %p65
      %p68 = scmp.ne.s32.totalorder %s51, %s67
      %p69 = scmp.eq.s32.totalorder %s22, 0
      %p70 = por %p68, %p69
      %p71 = scmp.le.s32.totalorder 1, %s16
      %p72 = scmp.lt.s32.totalorder %s16, 3
      %p73 = pnand %p71, %p72
      %p74 = pneg %p73
      // Predicated region
      $region9: #{tpu_custom_call.1} parent=5 // pred_check
        _
      $region10: #{tpu_custom_call.1} parent=5 // pred_check_branch
        %76 = sbr.rel (%p73) target = $region12
      $region11: #{tpu_custom_call.1} parent=5 // pred_region
        %s77 = ssub.s32 %s16, 1
        // Predicated region
        $region13: #{tpu_custom_call.1} parent=11 // pred_check
          %p78 = pneg %p37
        $region14: #{tpu_custom_call.1} parent=11 // pred_check_branch
          %80 = sbr.rel (%p78) target = $region16
        $region15: #{tpu_custom_call.1} parent=11 // pred_region
          %s82 = ssub.s32 256, 256
          %83 = vsyncadd [#allocation5], %s82
          %s84 = sshll.u32 [#allocation4], 4
          %s85 = int_to_ptr.vmem [resolvable:$true] %s84
          %90 = dma.hbm_to_vmem [thread:$0]  %s1, 256, %s85, [#allocation5], 128, 128, 8
        $region16: #{tpu_custom_call.1} parent=11 // pred_fallthru
          _
      $region12: #{tpu_custom_call.1} parent=5 // pred_fallthru
        _
      %p91 = scmp.lt.s32.totalorder %s16, 2
      // Predicated region
      $region17: #{tpu_custom_call.1} parent=5 // pred_check
        %p92 = pneg %p91
      $region18: #{tpu_custom_call.1} parent=5 // pred_check_branch
        %94 = sbr.rel (%p92) target = $region20
      $region19: #{tpu_custom_call.1} parent=5 // pred_region
        _
      $region20: #{tpu_custom_call.1} parent=5 // pred_fallthru
        _
      %p95 = scmp.le.s32.totalorder 1, %s16
      %p96 = scmp.lt.s32.totalorder %s16, 3
      %p97 = pnand %p95, %p96
      %p98 = pneg %p97
      // Predicated region
      $region21: #{tpu_custom_call.1} parent=5 // pred_check
        _
      $region22: #{tpu_custom_call.1} parent=5 // pred_check_branch
        %100 = sbr.rel (%p97) target = $region24
      $region23: #{tpu_custom_call.1} parent=5 // pred_region
        %s101 = ssub.s32 %s16, 1
        // Predicated region
        $region25: #{tpu_custom_call.1} parent=23 // pred_check
          %p102 = pneg %p37
        $region26: #{tpu_custom_call.1} parent=23 // pred_check_branch
          %104 = sbr.rel (%p102) target = $region28
        $region27: #{tpu_custom_call.1} parent=23 // pred_region
          %105 = dma.done [#allocation5], 256
        $region28: #{tpu_custom_call.1} parent=23 // pred_fallthru
          _
        %p106 = pneg %p37
        %p107 = pneg %p34
        %p108 = pneg %p63
        %p109 = pneg %p60
        %s110 = sand.u32 %s50, 1
        %s111 = scalar_lea.sflag [#allocation6], %s110
        %s112 = sand.u32 %s50, 1
        %s113 = smul.addr %s112, 8
        %s114 = scalar_lea.vmem [#allocation7], %s113
        %s115 = smul.u32 %s21, 8
        %s116 = sld [smem:[#allocation3 + %s115]]
        %s117 = scalar_lea.vmem [#allocation4], %s116
        %v118 = vld [vmem:[%s117] sm:$0x1]
        %119 = vst [vmem:[%s114] sm:$0x1] %v118
        %s120 = sadd.s32 %s115, 1
        %s121 = sld [smem:[#allocation3 + %s120]]
        %s122 = scalar_lea.vmem [#allocation4], %s121
        %v123 = vld [vmem:[%s122] sm:$0x1]
        %124 = vst [vmem:[%s114 + $0x1] sm:$0x1] %v123
        %s125 = sadd.s32 %s115, 2
        %s126 = sld [smem:[#allocation3 + %s125]]
        %s127 = scalar_lea.vmem [#allocation4], %s126
        %v128 = vld [vmem:[%s127] sm:$0x1]
        %129 = vst [vmem:[%s114 + $0x2] sm:$0x1] %v128
        %s130 = sadd.s32 %s115, 3
        %s131 = sld [smem:[#allocation3 + %s130]]
        %s132 = scalar_lea.vmem [#allocation4], %s131
        %v133 = vld [vmem:[%s132] sm:$0x1]
        %134 = vst [vmem:[%s114 + $0x3] sm:$0x1] %v133
        %s135 = sadd.s32 %s115, 4
        %s136 = sld [smem:[#allocation3 + %s135]]
        %s137 = scalar_lea.vmem [#allocation4], %s136
        %v138 = vld [vmem:[%s137] sm:$0x1]
        %139 = vst [vmem:[%s114 + $0x4] sm:$0x1] %v138
        %s140 = sadd.s32 %s115, 5
        %s141 = sld [smem:[#allocation3 + %s140]]
        %s142 = scalar_lea.vmem [#allocation4], %s141
        %v143 = vld [vmem:[%s142] sm:$0x1]
        %144 = vst [vmem:[%s114 + $0x5] sm:$0x1] %v143
        %s145 = sadd.s32 %s115, 6
        %s146 = sld [smem:[#allocation3 + %s145]]
        %s147 = scalar_lea.vmem [#allocation4], %s146
        %v148 = vld [vmem:[%s147] sm:$0x1]
        %149 = vst [vmem:[%s114 + $0x6] sm:$0x1] %v148
        %s150 = sadd.s32 %s115, 7
        %s151 = sld [smem:[#allocation3 + %s150]]
        %s152 = scalar_lea.vmem [#allocation4], %s151
        %v153 = vld [vmem:[%s152] sm:$0x1]
        %154 = vst [vmem:[%s114 + $0x7] sm:$0x1] %v153
        %s155 = sand.u32 %s50, 1
        %s156 = scalar_lea.sflag [#allocation6], %s155
        %s157 = sand.u32 %s50, 1
        %s158 = smul.addr %s157, 8
        %s159 = scalar_lea.vmem [#allocation7], %s158
        // Predicated region
        $region29: #{tpu_custom_call.1} parent=23 // pred_check
          %p160 = pneg %p60
        $region30: #{tpu_custom_call.1} parent=23 // pred_check_branch
          %162 = sbr.rel (%p160) target = $region32
        $region31: #{tpu_custom_call.1} parent=23 // pred_region
          %s164 = ssub.s32 128, 128
          %165 = vsyncadd %s156, %s164
          %s166 = smul.addr %s21, 128
          %s167 = scalar_lea.hbm %s2, %s166
          %s169 = sshll.u32 %s159, 4
          %s170 = int_to_ptr.vmem [resolvable:$true] %s169
          %172 = dma.vmem_to_hbm [thread:$0]  %s170, 128, %s167, %s156
        $region32: #{tpu_custom_call.1} parent=23 // pred_fallthru
          _
      $region24: #{tpu_custom_call.1} parent=5 // pred_fallthru
        _
      %p173 = scmp.le.s32.totalorder 2, %s16
      // Predicated region
      $region33: #{tpu_custom_call.1} parent=5 // pred_check
        %p174 = pneg %p173
      $region34: #{tpu_custom_call.1} parent=5 // pred_check_branch
        %176 = sbr.rel (%p174) target = $region36
      $region35: #{tpu_custom_call.1} parent=5 // pred_region
        %s177 = ssub.s32 %s16, 2
        // Predicated region
        $region37: #{tpu_custom_call.1} parent=35 // pred_check
          %p178 = pneg %p66
        $region38: #{tpu_custom_call.1} parent=35 // pred_check_branch
          %180 = sbr.rel (%p178) target = $region40
        $region39: #{tpu_custom_call.1} parent=35 // pred_region
          %s181 = sand.u32 %s51, 1
          %s182 = scalar_lea.sflag [#allocation6], %s181
          %s183 = sand.u32 %s51, 1
          %s184 = smul.addr %s183, 8
          %s185 = scalar_lea.vmem [#allocation7], %s184
          %186 = dma.done %s182, 128
        $region40: #{tpu_custom_call.1} parent=35 // pred_fallthru
          _
      $region36: #{tpu_custom_call.1} parent=5 // pred_fallthru
        _
    $region6: #{tpu_custom_call.1} parent=1 // loop_footer
      %s20 = sadd.s32 1, %s16
    $region7: #{tpu_custom_call.1} parent=1 // loop_footer_branch
      %15 = sbr.rel target = $region3
    $region8: #{tpu_custom_call.1} parent=1 // loop_exit
      _
    %187 = vsyncpa [#allocation5], 1
    %s188 = scalar_lea.sflag [#allocation5], 1
    %189 = vsyncpa %s188, 1
    %190 = vsyncpa [#allocation6], 1
    %s191 = scalar_lea.sflag [#allocation6], 1
    %192 = vsyncpa %s191, 1

</llo_original>
